<compile_context>
chip_gen: v7x
topology: tpu7x:2x2x1
jax: 0.10.0
libtpu: 0.0.40
codegen_flags: <defaults>
</compile_context>

<pallas_src>
import functools
import math

import numpy as np
import jax
import jax.numpy as jnp
from jax.experimental import pallas as pl
from jax.experimental.pallas import tpu as pltpu


@functools.lru_cache(maxsize=None)
def _vmem_limit_bytes():
    """Per-generation VMEM request.  Never ask for the full physical VMEM
    (v7x has only 64 MiB per TC) — leave headroom for compiler scratch and
    double-buffering.  v5e/v6e (128 MiB physical) still get 64 MiB."""
    cap = None
    try:
        cap = getattr(pltpu.get_tpu_info(), "vmem_capacity_bytes", None)
    except Exception:
        cap = None
    if not cap:
        cap = 128 * 1024 * 1024
    return int(min(64 * 1024 * 1024, (3 * cap) // 4))


def _round_up(x, m):
    return (x + m - 1) // m * m


def _pick_tile(n, cap, step):
    """Largest tile <= cap (multiple of `step`) that divides n; full dim if
    n <= cap.  Fall back to (cap, padded n) only if no divisor exists."""
    if n <= cap:
        return n, n
    start = cap - (cap % step)
    for t in range(start, step - 1, -step):
        if n % t == 0:
            return t, n
    return cap, _round_up(n, cap)


# ----------------------------------------------------------------------------
# Generic linear (used for the LoRA-patched qkv)
# ----------------------------------------------------------------------------
def _mm_kernel(x_ref, w_ref, *rest, has_bias):
    if has_bias:
        b_ref, o_ref = rest
    else:
        (o_ref,) = rest
    y = jnp.dot(x_ref[...], w_ref[...], preferred_element_type=jnp.float32)
    if has_bias:
        y = y + b_ref[...]
    o_ref[...] = y.astype(o_ref.dtype)


def pallas_linear(x, w, b=None, tile_m=1024, compute_dtype=jnp.bfloat16,
                  out_dtype=jnp.float32):
    """y = x @ w (+ b).  x: (M, K), w: (K, N), b: (N,) or None."""
    M, K = x.shape
    N = w.shape[1]
    # bf16 packs 16 rows per sublane group -> step M tiles by 16.
    tm, mp = _pick_tile(M, tile_m, 16)
    xp = x.astype(compute_dtype)
    if mp != M:
        xp = jnp.pad(xp, ((0, mp - M), (0, 0)))

    has_bias = b is not None
    operands = [xp, w.astype(compute_dtype)]
    in_specs = [pl.BlockSpec((tm, K), lambda i: (i, 0)),
                pl.BlockSpec((K, N), lambda i: (0, 0))]
    if has_bias:
        operands.append(jnp.reshape(b, (1, N)).astype(jnp.float32))
        in_specs.append(pl.BlockSpec((1, N), lambda i: (0, 0)))

    out = pl.pallas_call(
        functools.partial(_mm_kernel, has_bias=has_bias),
        out_shape=jax.ShapeDtypeStruct((mp, N), out_dtype),
        grid=(mp // tm,),
        in_specs=in_specs,
        out_specs=pl.BlockSpec((tm, N), lambda i: (i, 0)),
        compiler_params=pltpu.CompilerParams(
            dimension_semantics=("parallel",),
            vmem_limit_bytes=_vmem_limit_bytes()),
    )(*operands)
    return out[:M] if mp != M else out


def lora_qkv(x_bhwc, wqkv_t, bqkv, aq_t, bq_t, av_t, bv_t, tile_m=1024,
             compute_dtype=jnp.bfloat16):
    """_LoRA_qkv.forward: LoRA deltas folded into Wqkv (exact) -> one matmul."""
    B, H, W, C = x_bhwc.shape
    w_eff = wqkv_t.astype(jnp.float32)
    w_eff = w_eff.at[:, :C].add(aq_t.astype(jnp.float32) @ bq_t.astype(jnp.float32))
    w_eff = w_eff.at[:, 2 * C:].add(av_t.astype(jnp.float32) @ bv_t.astype(jnp.float32))
    x2 = x_bhwc.reshape(B * H * W, C)
    out = pallas_linear(x2, w_eff, bqkv, tile_m=tile_m,
                        compute_dtype=compute_dtype)
    return out.reshape(B, H, W, 3 * C)


# ----------------------------------------------------------------------------
# Fused per-pixel MLP (3 layers) + class projection, channel-major output.
# Input is NCHW so no transpose is needed on either side; pixels sit on the
# lane axis -> lane-dense loads and stores.  w3@w_proj folded offline.
# ----------------------------------------------------------------------------
def _mlp3t_kernel(x_ref, w1t_ref, b1_ref, w2t_ref, b2_ref, w3t_ref, b3_ref,
                  o_ref):
    cd = w1t_ref.dtype
    h = jnp.dot(w1t_ref[...], x_ref[...], preferred_element_type=jnp.float32)
    h = jnp.maximum(h + b1_ref[...], 0.0).astype(cd)
    h = jnp.dot(w2t_ref[...], h, preferred_element_type=jnp.float32)
    h = jnp.maximum(h + b2_ref[...], 0.0).astype(cd)
    h = jnp.dot(w3t_ref[...], h, preferred_element_type=jnp.float32)
    o_ref[...] = (h + b3_ref[...]).astype(o_ref.dtype)


def mlp3_proj_channel_major(feat_bchw, layers, w_proj, extra_bias=None,
                            tile_p=1024, compute_dtype=jnp.bfloat16,
                            out_dtype=jnp.bfloat16):
    """(B, Cin, H, W) -> (B, n_cls, H, W) bf16; MLP(3) + bias-free projection."""
    B, Cin, H, W = feat_bchw.shape
    (w1, b1), (w2, b2), (w3, b3) = layers
    d1, d2 = w1.shape[1], w2.shape[1]
    n_cls = w_proj.shape[1]

    # No ReLU after layer 3 -> fold the projection into layer 3 (exact).
    w3_eff = w3.astype(jnp.float32) @ w_proj.astype(jnp.float32)   # (d3, n_cls)
    b3_eff = b3.astype(jnp.float32) @ w_proj.astype(jnp.float32)   # (n_cls,)
    if extra_bias is not None:
        b3_eff = b3_eff + extra_bias

    HW = H * W
    x = feat_bchw.reshape(B, Cin, HW)
    tp, hwp = _pick_tile(HW, tile_p, 128)
    if hwp != HW:
        x = jnp.pad(x, ((0, 0), (0, 0), (0, hwp - HW)))
    f32 = jnp.float32

    out = pl.pallas_call(
        _mlp3t_kernel,
        out_shape=jax.ShapeDtypeStruct((B, n_cls, hwp), out_dtype),
        grid=(B, hwp // tp),
        in_specs=[
            pl.BlockSpec((None, Cin, tp), lambda b, i: (b, 0, i)),
            pl.BlockSpec((d1, Cin), lambda b, i: (0, 0)),
            pl.BlockSpec((d1, 1), lambda b, i: (0, 0)),
            pl.BlockSpec((d2, d1), lambda b, i: (0, 0)),
            pl.BlockSpec((d2, 1), lambda b, i: (0, 0)),
            pl.BlockSpec((n_cls, d2), lambda b, i: (0, 0)),
            pl.BlockSpec((n_cls, 1), lambda b, i: (0, 0)),
        ],
        out_specs=pl.BlockSpec((None, n_cls, tp), lambda b, i: (b, 0, i)),
        compiler_params=pltpu.CompilerParams(
            dimension_semantics=("parallel", "parallel"),
            vmem_limit_bytes=_vmem_limit_bytes()),
    )(x.astype(compute_dtype),
      w1.T.astype(compute_dtype), jnp.reshape(b1, (d1, 1)).astype(f32),
      w2.T.astype(compute_dtype), jnp.reshape(b2, (d2, 1)).astype(f32),
      w3_eff.T.astype(compute_dtype), jnp.reshape(b3_eff, (n_cls, 1)).astype(f32))
    if hwp != HW:
        out = out[:, :, :HW]
    return out.reshape(B, n_cls, H, W)


# ----------------------------------------------------------------------------
# Fused separable bilinear resize (align_corners=False) + cross-branch
# accumulation.  Both contractions (Rh @ X, then @ Rw_t) happen inside one
# kernel; the running accumulator is aliased input<->output so each branch
# adds into the big (B, n_cls, T, T) map with zero extra HBM passes.
# ----------------------------------------------------------------------------
def _bilinear_matrix(out_size, in_size):
    scale = in_size / out_size
    i = np.arange(out_size)
    src = np.maximum((i + 0.5) * scale - 0.5, 0.0)
    i0 = np.minimum(np.floor(src).astype(np.int64), in_size - 1)
    i1 = np.minimum(i0 + 1, in_size - 1)
    frac = (src - i0).astype(np.float32)
    R = np.zeros((out_size, in_size), np.float32)
    R[np.arange(out_size), i0] += 1.0 - frac
    R[np.arange(out_size), i1] += frac
    return jnp.asarray(R)


def _resize_acc_kernel(x_ref, rh_ref, rwt_ref, *rest, has_acc):
    if has_acc:
        acc_ref, o_ref = rest
    else:
        (o_ref,) = rest
    t = jnp.dot(rh_ref[...], x_ref[...], preferred_element_type=jnp.float32)
    y = jnp.dot(t.astype(rwt_ref.dtype), rwt_ref[...],
                preferred_element_type=jnp.float32)
    if has_acc:
        y = y + acc_ref[...]
    o_ref[...] = y.astype(o_ref.dtype)


def fused_resize_accumulate(x_bchw, out_h, out_w, acc=None, tile_h=256,
                            compute_dtype=jnp.bfloat16, out_dtype=jnp.float32):
    """acc' = (acc or 0) + bilinear_resize(x, (out_h, out_w)); one kernel."""
    B, C, H, W = x_bchw.shape
    # NOTE: keep Rh/Rw_t in f32 if bit-level parity with torch matters; the
    # op is mem-bound so bf16 here is a throughput (not accuracy-critical) pick.
    rh = _bilinear_matrix(out_h, H).astype(compute_dtype)       # (out_h, H)
    rwt = _bilinear_matrix(out_w, W).T.astype(compute_dtype)    # (W, out_w)
    th, _ = _pick_tile(out_h, tile_h, 8)
    if out_h % th != 0:
        th = out_h

    operands = [x_bchw.astype(compute_dtype), rh, rwt]
    in_specs = [
        pl.BlockSpec((None, None, H, W), lambda b, c, i: (b, c, 0, 0)),
        pl.BlockSpec((th, H), lambda b, c, i: (i, 0)),
        pl.BlockSpec((W, out_w), lambda b, c, i: (0, 0)),
    ]
    io_alias = {}
    if acc is not None:
        in_specs.append(pl.BlockSpec((None, None, th, out_w),
                                     lambda b, c, i: (b, c, i, 0)))
        operands.append(acc)
        io_alias = {len(operands) - 1: 0}

    return pl.pallas_call(
        functools.partial(_resize_acc_kernel, has_acc=acc is not None),
        out_shape=jax.ShapeDtypeStruct((B, C, out_h, out_w), out_dtype),
        grid=(B, C, out_h // th),
        in_specs=in_specs,
        out_specs=pl.BlockSpec((None, None, th, out_w),
                               lambda b, c, i: (b, c, i, 0)),
        input_output_aliases=io_alias,
        compiler_params=pltpu.CompilerParams(
            dimension_semantics=("parallel", "parallel", "parallel"),
            vmem_limit_bytes=_vmem_limit_bytes()),
    )(*operands)


# ----------------------------------------------------------------------------
# seg_fuse: per-branch MLP -> project to classes at native res (channel-major)
# -> fused resize + accumulate.  linear_fuse∘linear_pred folded offline; their
# bias folded into branch 0 (exact: bilinear rows sum to 1).
# ----------------------------------------------------------------------------
def seg_fuse(params, src, feat_s0, feat_s1, target_size):
    """LoRA_Sam.seg_fuse.  The real module upsamples to 1024x1024; here the
    target size is a parameter so small shapes can be used."""
    wf, bf_ = params["linear_fuse"]                 # (3*hd, hd), (hd,)
    wp, bp = params["linear_pred"]                  # (hd, n_cls), (n_cls,)
    hd = wf.shape[1]
    # Two back-to-back 1x1 convs with no nonlinearity -> one 96->25 projection,
    # applied per branch at native resolution (sum of per-branch 1x1 convs).
    w_fused = wf @ wp                               # (3*hd, n_cls)
    b_fused = bf_ @ wp + bp                         # (n_cls,)

    branches = [(src,     params["mlp_src"],     w_fused[0 * hd:1 * hd]),
                (feat_s0, params["mlp_feat_s0"], w_fused[1 * hd:2 * hd]),
                (feat_s1, params["mlp_feat_s1"], w_fused[2 * hd:3 * hd])]

    acc = None
    for idx, (feat, layers, w_proj) in enumerate(branches):
        extra = b_fused if idx == 0 else None       # bias fused, no extra pass
        proj = mlp3_proj_channel_major(feat, layers, w_proj, extra_bias=extra)
        acc = fused_resize_accumulate(proj, target_size, target_size, acc=acc)
    # TODO(synk): nn.Dropout2d(0.1) is treated as identity (inference mode).
    return acc


# ----------------------------------------------------------------------------
# Plain-JAX f32 references (original op order) for correctness checks
# ----------------------------------------------------------------------------
def _lora_qkv_reference(x_bhwc, wqkv_t, bqkv, aq_t, bq_t, av_t, bv_t):
    B, H, W, C = x_bhwc.shape
    x2 = x_bhwc.reshape(-1, C).astype(jnp.float32)
    qkv = x2 @ wqkv_t + bqkv
    new_q = x2 @ aq_t @ bq_t
    new_v = x2 @ av_t @ bv_t
    qkv = qkv.at[:, :C].add(new_q).at[:, 2 * C:].add(new_v)
    return qkv.reshape(B, H, W, 3 * C)


def _seg_fuse_reference(params, src, feat_s0, feat_s1, target_size):
    def mlp_ref(x, layers):
        for i, (w, b) in enumerate(layers):
            x = x @ w + b
            if i < len(layers) - 1:
                x = jnp.maximum(x, 0.0)
        return x

    def transform(feat, layers):
        B, C, H, W = feat.shape
        flat = jnp.transpose(feat.reshape(B, C, H * W), (0, 2, 1))
        out = mlp_ref(flat, layers)
        hd = out.shape[-1]
        out = jnp.transpose(out, (0, 2, 1)).reshape(B, hd, H, W)
        Rh = _bilinear_matrix(target_size, H)
        Rw = _bilinear_matrix(target_size, W)
        out = jnp.einsum('oh,bchw->bcow', Rh, out)
        out = jnp.einsum('pw,bcow->bcop', Rw, out)
        return out

    comb = jnp.concatenate([transform(src, params["mlp_src"]),
                            transform(feat_s0, params["mlp_feat_s0"]),
                            transform(feat_s1, params["mlp_feat_s1"])], axis=1)
    wf, bf_ = params["linear_fuse"]
    wp, bp = params["linear_pred"]
    x = jnp.einsum('bchw,cd->bdhw', comb, wf) + bf_[None, :, None, None]
    x = jnp.einsum('bdhw,dk->bkhw', x, wp) + bp[None, :, None, None]
    return x


# ----------------------------------------------------------------------------
# Deterministic parameter construction (matches the shapes in __init__)
# ----------------------------------------------------------------------------
def _xavier_uniform(key, fan_in, fan_out):
    bound = math.sqrt(6.0 / (fan_in + fan_out))
    return jax.random.uniform(key, (fan_in, fan_out), jnp.float32, -bound, bound)


def _kaiming_uniform_a5(key, fan_in, fan_out):
    gain = math.sqrt(2.0 / (1.0 + 5.0))             # a = sqrt(5)
    bound = gain * math.sqrt(3.0 / fan_in)
    return jax.random.uniform(key, (fan_in, fan_out), jnp.float32, -bound, bound)


def make_params(key, transformer_dim=256, lora_dim=32, r=4):
    keys = iter(jax.random.split(key, 32))
    hd = transformer_dim // 8                       # 32

    def mlp(dims):
        return [(_xavier_uniform(next(keys), din, dout),
                 jnp.zeros((dout,), jnp.float32))
                for din, dout in zip(dims[:-1], dims[1:])]

    return {
        "mlp_src":     mlp([transformer_dim, hd, hd, hd]),
        "mlp_feat_s0": mlp([hd, hd, hd, hd]),
        "mlp_feat_s1": mlp([transformer_dim // 4, hd, hd, hd]),
        "linear_fuse": (_xavier_uniform(next(keys), hd * 3, hd),
                        jnp.zeros((hd,), jnp.float32)),     # init.constant_(0)
        # linear_pred bias keeps torch's default (non-zero) conv bias init,
        # so the fused-bias path is actually exercised.
        "linear_pred": (_xavier_uniform(next(keys), hd, 25),
                        jax.random.uniform(next(keys), (25,), jnp.float32,
                                           -0.18, 0.18)),
        # LoRA-patched qkv of one encoder block (weights stored as (in, out))
        "qkv_w": _xavier_uniform(next(keys), lora_dim, 3 * lora_dim),
        "qkv_b": jax.random.normal(next(keys), (3 * lora_dim,), jnp.float32) * 0.02,
        "lora_aq": _kaiming_uniform_a5(next(keys), lora_dim, r),
        "lora_bq": jnp.zeros((r, lora_dim), jnp.float32),   # reset_parameters: zeros_
        "lora_av": _kaiming_uniform_a5(next(keys), lora_dim, r),
        "lora_bv": jnp.zeros((r, lora_dim), jnp.float32),
    }


# ----------------------------------------------------------------------------
if __name__ == "__main__":
    key = jax.random.PRNGKey(0)
    kp, kx, kf, k0, k1, kb1, kb2 = jax.random.split(key, 7)

    params = make_params(kp, transformer_dim=256, lora_dim=32, r=4)

    # ---- LoRA qkv of one encoder block (synthetic activation, B,H,W,C) ----
    x_enc = jax.random.normal(kx, (2, 8, 8, 32), jnp.float32)
    qkv_out = lora_qkv(x_enc, params["qkv_w"], params["qkv_b"],
                       params["lora_aq"], params["lora_bq"],
                       params["lora_av"], params["lora_bv"])
    ref_qkv = _lora_qkv_reference(x_enc, params["qkv_w"], params["qkv_b"],
                                  params["lora_aq"], params["lora_bq"],
                                  params["lora_av"], params["lora_bv"])
    assert jnp.allclose(qkv_out, ref_qkv, atol=5e-2, rtol=5e-2)

    # Extra check with non-zero LoRA B matrices (exercises the weight fold).
    bq_nz = 0.1 * jax.random.normal(kb1, params["lora_bq"].shape, jnp.float32)
    bv_nz = 0.1 * jax.random.normal(kb2, params["lora_bv"].shape, jnp.float32)
    qkv_out2 = lora_qkv(x_enc, params["qkv_w"], params["qkv_b"],
                        params["lora_aq"], bq_nz, params["lora_av"], bv_nz)
    ref_qkv2 = _lora_qkv_reference(x_enc, params["qkv_w"], params["qkv_b"],
                                   params["lora_aq"], bq_nz,
                                   params["lora_av"], bv_nz)
    assert jnp.allclose(qkv_out2, ref_qkv2, atol=5e-2, rtol=5e-2)

    # TODO(synk): sam.forward_image / sam._forward_sam_heads (full SAM2
    # backbone + mask decoder) are external sub-models and are not translated;
    # synthetic feature maps with the module's channel counts stand in below.
    feat    = jax.random.normal(kf, (2, 256, 4, 4),  jnp.float32)   # vision_features
    feat_s0 = jax.random.normal(k0, (2, 32, 16, 16), jnp.float32)   # backbone_fpn[0]
    feat_s1 = jax.random.normal(k1, (2, 64, 8, 8),   jnp.float32)   # backbone_fpn[1]

    # Real module upsamples to 1024x1024; 32 keeps the demo small.
    seg_out = seg_fuse(params, feat, feat_s0, feat_s1, target_size=32)
    seg_ref = _seg_fuse_reference(params, feat, feat_s0, feat_s1, target_size=32)
    err = float(jnp.max(jnp.abs(seg_out - seg_ref)))
    scale = float(jnp.max(jnp.abs(seg_ref)))
    assert err <= 5e-2 * scale + 1e-3, (err, scale)

    # TODO(synk): the final m_output reshape(2, B, 9, fh, fw).mean(0) depends on
    # _forward_sam_heads output and is therefore not reproduced here.

    jax.block_until_ready((qkv_out, qkv_out2, seg_out))
    assert qkv_out.shape == (2, 8, 8, 96)
    assert seg_out.shape == (2, 25, 32, 32)
    print("KERNEL_OK")
</pallas_src>

<mosaic_0001>
module attributes {stable_mosaic.version = 11 : i64} {
  func.func @_mm_kernel(%arg0: i32, %arg1: memref<128x32xbf16, #tpu.memory_space<vmem>>, %arg2: memref<32x96xbf16, #tpu.memory_space<vmem>>, %arg3: memref<1x96xf32, #tpu.memory_space<vmem>>, %arg4: memref<128x96xf32, #tpu.memory_space<vmem>>) attributes {dimension_semantics = [#tpu.dimension_semantics<parallel>], iteration_bounds = array<i64: 1>, scalar_prefetch = 0 : i64, scratch_operands = 0 : i64, tpu.core_type = #tpu.core_type<tc>, window_params = [{transform_indices = @transform_0, window_bounds = array<i64: 128, 32>}, {pipeline_mode = #tpu.pipeline_mode<synchronous>, transform_indices = @transform_1, window_bounds = array<i64: 32, 96>}, {pipeline_mode = #tpu.pipeline_mode<synchronous>, transform_indices = @transform_2, window_bounds = array<i64: 1, 96>}, {transform_indices = @transform_3, window_bounds = array<i64: 128, 96>}]} {
    %c0 = arith.constant 0 : index
    %c0_0 = arith.constant 0 : index
    %0 = vector.load %arg1[%c0, %c0_0] : memref<128x32xbf16, #tpu.memory_space<vmem>>, vector<128x32xbf16>
    %c0_1 = arith.constant 0 : index
    %c0_2 = arith.constant 0 : index
    %1 = vector.load %arg2[%c0_1, %c0_2] : memref<32x96xbf16, #tpu.memory_space<vmem>>, vector<32x96xbf16>
    %cst = arith.constant dense<0.000000e+00> : vector<128x96xf32>
    %2 = tpu.matmul %0, %1, %cst {dimension_numbers = #tpu.dot_dimension_numbers<[1], [0], [0], [1], [0, 0, 1, 1], [], []>} : vector<128x32xbf16>, vector<32x96xbf16>, vector<128x96xf32> -> vector<128x96xf32>
    %c0_3 = arith.constant 0 : index
    %c0_4 = arith.constant 0 : index
    %3 = vector.load %arg3[%c0_3, %c0_4] : memref<1x96xf32, #tpu.memory_space<vmem>>, vector<1x96xf32>
    %4 = vector.broadcast %3 : vector<1x96xf32> to vector<128x96xf32>
    %5 = arith.addf %2, %4 : vector<128x96xf32>
    %c0_5 = arith.constant 0 : index
    %c0_6 = arith.constant 0 : index
    %6 = vector.load %arg4[%c0_5, %c0_6] : memref<128x96xf32, #tpu.memory_space<vmem>>, vector<128x96xf32>
    tpu.vector_store %arg4[%c0_5, %c0_6], %5 {strides = array<i32>} : memref<128x96xf32, #tpu.memory_space<vmem>>, vector<128x96xf32>,
    return
  }
  func.func @transform_0(%arg0: i32) -> (i32, i32) {
    %c0_i32 = arith.constant 0 : i32
    %c0_i32_0 = arith.constant 0 : i32
    return %arg0, %c0_i32 : i32, i32
  }
  func.func @transform_1(%arg0: i32) -> (i32, i32) {
    %c0_i32 = arith.constant 0 : i32
    %c0_i32_0 = arith.constant 0 : i32
    %c0_i32_1 = arith.constant 0 : i32
    return %c0_i32, %c0_i32_0 : i32, i32
  }
  func.func @transform_2(%arg0: i32) -> (i32, i32) {
    %c0_i32 = arith.constant 0 : i32
    %c0_i32_0 = arith.constant 0 : i32
    %c0_i32_1 = arith.constant 0 : i32
    return %c0_i32, %c0_i32_0 : i32, i32
  }
  func.func @transform_3(%arg0: i32) -> (i32, i32) {
    %c0_i32 = arith.constant 0 : i32
    %c0_i32_0 = arith.constant 0 : i32
    return %arg0, %c0_i32 : i32, i32
  }
}

</mosaic_0001>

<llo_original>
// kernel: tpu_custom_call.1
$region0: #{tpu_custom_call.1}
  #allocation0 [shape = 'u32[]', space=smem, size = 0x4, offset = 0x4, fixed_abs, tag = 'smem constant byte address 0x4 - core index']
  #allocation1 [shape = 'u32[144,128]{1,0:T(1,128)}', space=vmem, size = 0x12000, scoped, tag = 'internal scratch']
  %s0 = inlined_call_operand.hbm [shape: bf16[128,32], index: 0, kind: input, shape index: {}]
  %s1 = inlined_call_operand.hbm [shape: bf16[32,96], index: 1, kind: input, shape index: {}]
  %s2 = inlined_call_operand.hbm [shape: f32[1,96], index: 2, kind: input, shape index: {}]
  %s3 = inlined_call_operand.hbm [shape: f32[128,96], index: 3, kind: output, shape index: {}]
  %s4 = sld [smem:[#allocation0]]
  $region34: #{tpu_custom_call.1} parent=0
    _
  %s6 = ssub.s32 1, %s4
  %s7 = scalar_select 0, %s6, %s4
  $region1: #{tpu_custom_call.1} parent=0
    #allocation2 [shape = 'u8[32768]{0}', space=vmem, size = 0x8000, scoped, tag = 'input window, operand 0, single buffered']
    #allocation3 [shape = 's32[1]{0}', space=sflag, size = 0x4, scoped, tag = 'scoped memory for tpu_custom_call.1']
    #allocation4 [shape = 's32[1]{0}', space=sflag, size = 0x4, scoped, tag = 'scoped memory for tpu_custom_call.1']
    #allocation5 [shape = 'u8[8192]{0}', space=vmem, size = 0x2000, scoped, tag = 'input window, operand 1, single buffered']
    #allocation6 [shape = 's32[1]{0}', space=sflag, size = 0x4, scoped, tag = 'scoped memory for tpu_custom_call.1']
    #allocation7 [shape = 'u8[512]{0}', space=vmem, size = 0x400, scoped, tag = 'input window, operand 2, single buffered']
    #allocation8 [shape = 'u8[65536]{0}', space=vmem, size = 0x10000, scoped, tag = 'output window, operand 0, single buffered']
    %8 = vsyncpa [#allocation3], 0
    %9 = vsyncpa [#allocation6], 0
    %10 = vsyncpa [#allocation4], 0
    // Predicated region
    $region2: #{tpu_custom_call.1} parent=1 // pred_check
      _
    $region3: #{tpu_custom_call.1} parent=1 // pred_check_branch
      %12 = sbr.rel (0) target = $region5
    $region4: #{tpu_custom_call.1} parent=1 // pred_region
      %s14 = ssub.s32 1024, 1024
      %15 = vsyncadd [#allocation3], %s14
      %s16 = sshll.u32 [#allocation2], 4
      %s17 = int_to_ptr.vmem [resolvable:$true] %s16
      %22 = dma.hbm_to_vmem [thread:$0]  %s0, 1024, %s17, [#allocation3], 64, 64, 4
    $region5: #{tpu_custom_call.1} parent=1 // pred_fallthru
      _
    // Predicated region
    $region6: #{tpu_custom_call.1} parent=1 // pred_check
      _
    $region7: #{tpu_custom_call.1} parent=1 // pred_check_branch
      %24 = sbr.rel (0) target = $region9
    $region8: #{tpu_custom_call.1} parent=1 // pred_region
      %s26 = ssub.s32 256, 256
      %27 = vsyncadd [#allocation6], %s26
      %s28 = sshll.u32 [#allocation5], 4
      %s29 = int_to_ptr.vmem [resolvable:$true] %s28
      %34 = dma.hbm_to_vmem [thread:$0]  %s1, 256, %s29, [#allocation6], 64, 64, 4
    $region9: #{tpu_custom_call.1} parent=1 // pred_fallthru
      _
    // Predicated region
    $region10: #{tpu_custom_call.1} parent=1 // pred_check
      _
    $region11: #{tpu_custom_call.1} parent=1 // pred_check_branch
      %36 = sbr.rel (0) target = $region13
    $region12: #{tpu_custom_call.1} parent=1 // pred_region
      %s38 = ssub.s32 16, 16
      %39 = vsyncadd [#allocation6], %s38
      %s41 = sshll.u32 [#allocation7], 4
      %s42 = int_to_ptr.vmem [resolvable:$true] %s41
      %44 = dma.hbm_to_vmem [thread:$0]  %s2, 16, %s42, [#allocation6]
    $region13: #{tpu_custom_call.1} parent=1 // pred_fallthru
      _
    // Predicated region
    $region14: #{tpu_custom_call.1} parent=1 // pred_check
      _
    $region15: #{tpu_custom_call.1} parent=1 // pred_check_branch
      %46 = sbr.rel (0) target = $region17
    $region16: #{tpu_custom_call.1} parent=1 // pred_region
      %47 = dma.done [#allocation3], 1024
    $region17: #{tpu_custom_call.1} parent=1 // pred_fallthru
      _
    // Predicated region
    $region18: #{tpu_custom_call.1} parent=1 // pred_check
      _
    $region19: #{tpu_custom_call.1} parent=1 // pred_check_branch
      %49 = sbr.rel (0) target = $region21
    $region20: #{tpu_custom_call.1} parent=1 // pred_region
      %50 = dma.done [#allocation6], 256
    $region21: #{tpu_custom_call.1} parent=1 // pred_fallthru
      _
    // Predicated region
    $region22: #{tpu_custom_call.1} parent=1 // pred_check
      _
    $region23: #{tpu_custom_call.1} parent=1 // pred_check_branch
      %52 = sbr.rel (0) target = $region25
    $region24: #{tpu_custom_call.1} parent=1 // pred_region
      %53 = dma.done [#allocation6], 16
    $region25: #{tpu_custom_call.1} parent=1 // pred_fallthru
      _
    %v55 = vld [vmem:[#allocation2] sm:$0xf]
    %v56 = vld [vmem:[#allocation2 + $0x4] sm:$0xf]
    %v57 = vld [vmem:[#allocation2 + $0x8] sm:$0xf]
    %v58 = vld [vmem:[#allocation2 + $0xc] sm:$0xf]
    %v59 = vld [vmem:[#allocation2 + $0x10] sm:$0xf]
    %v60 = vld [vmem:[#allocation2 + $0x14] sm:$0xf]
    %v61 = vld [vmem:[#allocation2 + $0x18] sm:$0xf]
    %v62 = vld [vmem:[#allocation2 + $0x1c] sm:$0xf]
    %v63 = vld [vmem:[#allocation2 + $0x20] sm:$0xf]
    %v64 = vld [vmem:[#allocation2 + $0x24] sm:$0xf]
    %v65 = vld [vmem:[#allocation2 + $0x28] sm:$0xf]
    %v66 = vld [vmem:[#allocation2 + $0x2c] sm:$0xf]
    %v67 = vld [vmem:[#allocation2 + $0x30] sm:$0xf]
    %v68 = vld [vmem:[#allocation2 + $0x34] sm:$0xf]
    %v69 = vld [vmem:[#allocation2 + $0x38] sm:$0xf]
    %v70 = vld [vmem:[#allocation2 + $0x3c] sm:$0xf]
    %v71 = vld [vmem:[#allocation5] sm:$0xf]
    %v72 = vld [vmem:[#allocation5 + $0x4] sm:$0xf]
    %v73 = vld [vmem:[#allocation5 + $0x8] sm:$0xf]
    %v74 = vld [vmem:[#allocation5 + $0xc] sm:$0xf]
    %v75 = vld [vmem:[#allocation7] sm:$0x1]
    %v77 = vlaneseq
    %v78 = vshrl.u32 %v77, 7
    %v79 = vsub.s32 0, %v78
    %v80 = vrot.slane %v75, %v79
    %v98 = vunpack.c.l.b16 %v55
    %v99 = vunpack.c.l.b16 %v56
    %v100 = vunpack.c.l.b16 %v57
    %v101 = vunpack.c.l.b16 %v58
    %v102 = vunpack.c.l.b16 %v59
    %v103 = vunpack.c.l.b16 %v60
    %v104 = vunpack.c.l.b16 %v61
    %v105 = vunpack.c.l.b16 %v62
    %v106 = vunpack.c.l.b16 %v63
    %v107 = vunpack.c.l.b16 %v64
    %v108 = vunpack.c.l.b16 %v65
    %v109 = vunpack.c.l.b16 %v66
    %v110 = vunpack.c.l.b16 %v67
    %v111 = vunpack.c.l.b16 %v68
    %v112 = vunpack.c.l.b16 %v69
    %v113 = vunpack.c.l.b16 %v70
    %v114 = vpack.c.b16 %v99, %v98
    %v115 = vpack.c.b16 %v101, %v100
    %v116 = vpack.c.b16 %v103, %v102
    %v117 = vpack.c.b16 %v105, %v104
    %v118 = vpack.c.b16 %v107, %v106
    %v119 = vpack.c.b16 %v109, %v108
    %v120 = vpack.c.b16 %v111, %v110
    %v121 = vpack.c.b16 %v113, %v112
    %v126 = vunpack.c.l.b16 %v71
    %v127 = vunpack.c.l.b16 %v72
    %v128 = vunpack.c.l.b16 %v73
    %v129 = vunpack.c.l.b16 %v74
    %v130 = vpack.c.b16 %v127, %v126
    %v131 = vpack.c.b16 %v129, %v128
    %vm134 = vcmask 261120
    %v136 = vsel %vm134, %v114, 0
    %v139 = vsel %vm134, %v115, 0
    %v142 = vsel %vm134, %v116, 0
    %v145 = vsel %vm134, %v117, 0
    %v148 = vsel %vm134, %v118, 0
    %v151 = vsel %vm134, %v119, 0
    %v154 = vsel %vm134, %v120, 0
    %v157 = vsel %vm134, %v121, 0
    %159 = vmatprep.subr.bf16.mxu0 0
    %160 = vmatpush1.bf16.msra.mxu0 %v130
    %161 = vmatprep.subr.bf16.mxu0 0
    %162 = vmatpush1.bf16.msra.mxu0 %v131
    %163 = vmatprep.subr.bf16.mxu0 0
    %164 = vmatpush1.bf16.msra.mxu0 0
    %165 = vmatprep.subr.bf16.mxu0 0
    %166 = vmatpush1.bf16.msra.mxu0 0
    %167 = vmatprep.subr.bf16.mxu0 0
    %168 = vmatpush1.bf16.msra.mxu0 0
    %169 = vmatprep.subr.bf16.mxu0 0
    %170 = vmatpush1.bf16.msra.mxu0 0
    %171 = vmatprep.subr.bf16.mxu0 0
    %172 = vmatpush1.bf16.msra.mxu0 0
    %173 = vmatprep.subr.bf16.mxu0 0
    %174 = vmatpush1.bf16.msra.mxu0 0
    %175 = vmatprep.subr.bf16.mxu0 0
    %176 = vmatpush1.bf16.msra.mxu0 0
    %177 = vmatprep.subr.bf16.mxu0 0
    %178 = vmatpush1.bf16.msra.mxu0 0
    %179 = vmatprep.subr.bf16.mxu0 0
    %180 = vmatpush1.bf16.msra.mxu0 0
    %181 = vmatprep.subr.bf16.mxu0 0
    %182 = vmatpush1.bf16.msra.mxu0 0
    %183 = vmatprep.subr.bf16.mxu0 0
    %184 = vmatpush1.bf16.msra.mxu0 0
    %185 = vmatprep.subr.bf16.mxu0 0
    %186 = vmatpush1.bf16.msra.mxu0 0
    %187 = vmatprep.subr.bf16.mxu0 0
    %188 = vmatpush1.bf16.msra.mxu0 0
    %189 = vmatprep.subr.bf16.mxu0 0
    %190 = vmatpush1.bf16.msra.mxu0 0
    %191 = vmatprep.mubr.bf16.mxu0 0
    %192 = vmatmul.mubr.bf16.gmra.mrb[0].mxu0 %v136
    %v193 = vpop.f32.mrb[0].mxu0
    %v194 = vadd.f32 %v80, %v193
    %v195 = vpop.f32.mrb[0].mxu0
    %v196 = vpop.f32.mrb[0].mxu0
    %v197 = vadd.f32 %v80, %v196
    %v198 = vpop.f32.mrb[0].mxu0
    %199 = vmatprep.mubr.bf16.mxu0 0
    %200 = vmatmul.mubr.bf16.gmra.mrb[0].mxu0 %v139
    %v201 = vpop.f32.mrb[0].mxu0
    %v202 = vadd.f32 %v80, %v201
    %v203 = vpop.f32.mrb[0].mxu0
    %v204 = vpop.f32.mrb[0].mxu0
    %v205 = vadd.f32 %v80, %v204
    %v206 = vpop.f32.mrb[0].mxu0
    %207 = vmatprep.mubr.bf16.mxu0 0
    %208 = vmatmul.mubr.bf16.gmra.mrb[0].mxu0 %v142
    %v209 = vpop.f32.mrb[0].mxu0
    %v210 = vadd.f32 %v80, %v209
    %v211 = vpop.f32.mrb[0].mxu0
    %v212 = vpop.f32.mrb[0].mxu0
    %v213 = vadd.f32 %v80, %v212
    %v214 = vpop.f32.mrb[0].mxu0
    %215 = vmatprep.mubr.bf16.mxu0 0
    %216 = vmatmul.mubr.bf16.gmra.mrb[0].mxu0 %v145
    %v217 = vpop.f32.mrb[0].mxu0
    %v218 = vadd.f32 %v80, %v217
    %v219 = vpop.f32.mrb[0].mxu0
    %v220 = vpop.f32.mrb[0].mxu0
    %v221 = vadd.f32 %v80, %v220
    %v222 = vpop.f32.mrb[0].mxu0
    %223 = vmatprep.mubr.bf16.mxu0 0
    %224 = vmatmul.mubr.bf16.gmra.mrb[0].mxu0 %v148
    %v225 = vpop.f32.mrb[0].mxu0
    %v226 = vadd.f32 %v80, %v225
    %v227 = vpop.f32.mrb[0].mxu0
    %v228 = vpop.f32.mrb[0].mxu0
    %v229 = vadd.f32 %v80, %v228
    %v230 = vpop.f32.mrb[0].mxu0
    %231 = vmatprep.mubr.bf16.mxu0 0
    %232 = vmatmul.mubr.bf16.gmra.mrb[0].mxu0 %v151
    %v233 = vpop.f32.mrb[0].mxu0
    %v234 = vadd.f32 %v80, %v233
    %v235 = vpop.f32.mrb[0].mxu0
    %v236 = vpop.f32.mrb[0].mxu0
    %v237 = vadd.f32 %v80, %v236
    %v238 = vpop.f32.mrb[0].mxu0
    %239 = vmatprep.mubr.bf16.mxu0 0
    %240 = vmatmul.mubr.bf16.gmra.mrb[0].mxu0 %v154
    %v241 = vpop.f32.mrb[0].mxu0
    %v242 = vadd.f32 %v80, %v241
    %v243 = vpop.f32.mrb[0].mxu0
    %v244 = vpop.f32.mrb[0].mxu0
    %v245 = vadd.f32 %v80, %v244
    %v246 = vpop.f32.mrb[0].mxu0
    %247 = vmatprep.mubr.bf16.mxu0 0
    %248 = vmatmul.mubr.bf16.gmra.mrb[0].mxu0 %v157
    %v249 = vpop.f32.mrb[0].mxu0
    %v250 = vadd.f32 %v80, %v249
    %v251 = vpop.f32.mrb[0].mxu0
    %v252 = vpop.f32.mrb[0].mxu0
    %v253 = vadd.f32 %v80, %v252
    %v254 = vpop.f32.mrb[0].mxu0
    %255 = vdwg.mxu0
    %vm256 = vcmask 785408
    %257 = vst.msk [vmem:[#allocation8] sm:$0xff] %vm256, %v194
    %258 = vst.msk [vmem:[#allocation8 + $0x8] sm:$0xff] %vm256, %v197
    %259 = vst.msk [vmem:[#allocation8 + $0x10] sm:$0xff] %vm256, %v202
    %260 = vst.msk [vmem:[#allocation8 + $0x18] sm:$0xff] %vm256, %v205
    %261 = vst.msk [vmem:[#allocation8 + $0x20] sm:$0xff] %vm256, %v210
    %262 = vst.msk [vmem:[#allocation8 + $0x28] sm:$0xff] %vm256, %v213
    %263 = vst.msk [vmem:[#allocation8 + $0x30] sm:$0xff] %vm256, %v218
    %264 = vst.msk [vmem:[#allocation8 + $0x38] sm:$0xff] %vm256, %v221
    %265 = vst.msk [vmem:[#allocation8 + $0x40] sm:$0xff] %vm256, %v226
    %266 = vst.msk [vmem:[#allocation8 + $0x48] sm:$0xff] %vm256, %v229
    %267 = vst.msk [vmem:[#allocation8 + $0x50] sm:$0xff] %vm256, %v234
    %268 = vst.msk [vmem:[#allocation8 + $0x58] sm:$0xff] %vm256, %v237
    %269 = vst.msk [vmem:[#allocation8 + $0x60] sm:$0xff] %vm256, %v242
    %270 = vst.msk [vmem:[#allocation8 + $0x68] sm:$0xff] %vm256, %v245
    %271 = vst.msk [vmem:[#allocation8 + $0x70] sm:$0xff] %vm256, %v250
    %272 = vst.msk [vmem:[#allocation8 + $0x78] sm:$0xff] %vm256, %v253
    // Predicated region
    $region26: #{tpu_custom_call.1} parent=1 // pred_check
      _
    $region27: #{tpu_custom_call.1} parent=1 // pred_check_branch
      %274 = sbr.rel (0) target = $region29
    $region28: #{tpu_custom_call.1} parent=1 // pred_region
      %s276 = ssub.s32 2048, 2048
      %277 = vsyncadd [#allocation4], %s276
      %s278 = sshll.u32 [#allocation8], 4
      %s279 = int_to_ptr.vmem [resolvable:$true] %s278
      %284 = dma.vmem_to_hbm [thread:$0]  %s279, 2048, %s3, [#allocation4], 128, 128, 8
    $region29: #{tpu_custom_call.1} parent=1 // pred_fallthru
      _
    // Predicated region
    $region30: #{tpu_custom_call.1} parent=1 // pred_check
      _
    $region31: #{tpu_custom_call.1} parent=1 // pred_check_branch
      %286 = sbr.rel (0) target = $region33
    $region32: #{tpu_custom_call.1} parent=1 // pred_region
      %287 = dma.done [#allocation4], 2048
    $region33: #{tpu_custom_call.1} parent=1 // pred_fallthru
      _
    %288 = vsyncpa [#allocation3], 1
    %289 = vsyncpa [#allocation6], 1
    %290 = vsyncpa [#allocation4], 1

</llo_original>
